<compile_context>
chip_gen: v7x
topology: tpu7x:2x2x1
jax: 0.10.0
libtpu: 0.0.40
codegen_flags: <defaults>
</compile_context>

<pallas_src>
import functools

import jax
import jax.numpy as jnp
from jax import lax
from jax.experimental import pallas as pl
from jax.experimental.pallas import tpu as pltpu

H1, H2 = 60, 40          # hidden widths from the PyTorch module
ROW_CHUNK = 128          # in-kernel row chunk for large batch tiles
MAX_TILE = 2048          # cap on rows per grid step


def _round_up(x, mult):
    return ((x + mult - 1) // mult) * mult


def mlp_kernel(x_ref, w1_ref, b1_ref, w2_ref, b2_ref, w3_ref, b3_ref, out_ref,
               *, row_chunk):
    # Fused MLP: bf16 MXU matmuls with f32 accumulate, f32 bias + ReLU on the
    # VPU, one store of the real-width output per row chunk.
    w1 = w1_ref[...]
    w2 = w2_ref[...]
    w3 = w3_ref[...]

    tb = x_ref.shape[0]
    rows = min(tb, row_chunk)

    # Hoist bias broadcasts out of the (unrolled) chunk loop: JAX does not CSE
    # broadcast_in_dim, so materialize them once per kernel invocation.
    b1 = jnp.broadcast_to(b1_ref[...], (rows, w1.shape[1]))
    b2 = jnp.broadcast_to(b2_ref[...], (rows, w2.shape[1]))
    b3 = jnp.broadcast_to(b3_ref[...], (rows, w3.shape[1]))

    def fused(x_f32):
        # In-kernel bf16 cast of x (rides a free VALU slot; avoids a separate
        # wrapper-side cast pass over HBM).
        x = x_f32.astype(jnp.bfloat16)
        h1 = jnp.dot(x, w1, preferred_element_type=jnp.float32) + b1
        r1 = jnp.maximum(h1, 0.0).astype(jnp.bfloat16)
        h2 = jnp.dot(r1, w2, preferred_element_type=jnp.float32) + b2
        r2 = jnp.maximum(h2, 0.0).astype(jnp.bfloat16)
        return jnp.dot(r2, w3, preferred_element_type=jnp.float32) + b3

    if tb <= row_chunk:
        # Small tile: single pass, everything stays in vregs.
        out_ref[...] = fused(x_ref[...]).astype(out_ref.dtype)
    else:
        # Large tile: tb is a multiple of row_chunk (guaranteed by wrapper).
        nsteps = tb // row_chunk

        def body(i, carry):
            r = pl.multiple_of(i * row_chunk, row_chunk)
            out_ref[pl.ds(r, row_chunk), :] = (
                fused(x_ref[pl.ds(r, row_chunk), :]).astype(out_ref.dtype))
            return carry

        # unroll=2: keeps LLO scheduling visibility without vreg spills.
        lax.fori_loop(0, nsteps, body, 0, unroll=2)


@jax.jit
def mlp_forward(x, w1, b1, w2, b2, w3, b3):
    B, m = x.shape
    n = w3.shape[1]
    out_dtype = x.dtype

    # Batch tiling:
    #  * B <= 128: one full-batch tile (block == full dim, always legal).
    #  * B  > 128: 128-row-granule tiles sized for >= ~8 grid steps (so the
    #    "parallel" axis can shard across both v7x TensorCores), capped at
    #    2048 rows (a few hundred KB VMEM/step, trivially within limits).
    #  No batch padding: ragged last tile handled by Pallas (rows independent,
    #  OOB writes masked).
    if B <= ROW_CHUNK:
        tb = B
    else:
        tb = min(MAX_TILE, _round_up(-(-B // 8), ROW_CHUNK))
    grid = (pl.cdiv(B, tb),)

    # Weights to bf16 for the MXU (tiny arrays, negligible wrapper cost);
    # biases stay f32 and add into the f32 accumulator.  x and the output
    # stay f32 end-to-end in HBM (no pad, no extra passes).
    w1b = w1.astype(jnp.bfloat16)
    w2b = w2.astype(jnp.bfloat16)
    w3b = w3.astype(jnp.bfloat16)
    b1f = b1.astype(jnp.float32)
    b2f = b2.astype(jnp.float32)
    b3f = b3.astype(jnp.float32)

    flops = 2 * B * (m * H1 + H1 * H2 + H2 * n)
    bytes_accessed = (B * m * 4                          # x (f32 read)
                      + B * n * 4                        # out (f32 write)
                      + (m * H1 + H1 * H2 + H2 * n) * 2  # bf16 weights
                      + (H1 + H2 + n) * 4)               # f32 biases

    return pl.pallas_call(
        functools.partial(mlp_kernel, row_chunk=ROW_CHUNK),
        out_shape=jax.ShapeDtypeStruct((B, n), out_dtype),
        grid=grid,
        in_specs=[
            pl.BlockSpec((tb, m), lambda i: (i, 0)),    # x tile over batch
            pl.BlockSpec((m, H1), lambda i: (0, 0)),    # W1 (resident)
            pl.BlockSpec((1, H1), lambda i: (0, 0)),    # b1
            pl.BlockSpec((H1, H2), lambda i: (0, 0)),   # W2
            pl.BlockSpec((1, H2), lambda i: (0, 0)),    # b2
            pl.BlockSpec((H2, n), lambda i: (0, 0)),    # W3 (no lane pad)
            pl.BlockSpec((1, n), lambda i: (0, 0)),     # b3
        ],
        out_specs=pl.BlockSpec((tb, n), lambda i: (i, 0)),
        compiler_params=pltpu.CompilerParams(
            dimension_semantics=("parallel",)),
        cost_estimate=pl.CostEstimate(
            flops=flops, transcendentals=0, bytes_accessed=bytes_accessed),
    )(x, w1b, b1f, w2b, b2f, w3b, b3f)


def init_linear(key, fan_in, fan_out, dtype=jnp.float32):
    # Deterministic PyTorch-style uniform init; weight stored as (in, out).
    kw, kb = jax.random.split(key)
    bound = 1.0 / float(fan_in) ** 0.5
    w = jax.random.uniform(kw, (fan_in, fan_out), dtype, -bound, bound)
    b = jax.random.uniform(kb, (1, fan_out), dtype, -bound, bound)
    return w, b


def ref_f32(x, w1, b1, w2, b2, w3, b3):
    # Exact f32 forward of the PyTorch module.
    r1 = jnp.maximum(x @ w1 + b1, 0.0)
    r2 = jnp.maximum(r1 @ w2 + b2, 0.0)
    return r2 @ w3 + b3


if __name__ == "__main__":
    m, n = 32, 16       # MLP(m, n)

    key = jax.random.PRNGKey(0)
    kx, k1, k2, k3 = jax.random.split(key, 4)

    w1, b1 = init_linear(k1, m, H1)
    w2, b2 = init_linear(k2, H1, H2)
    w3, b3 = init_linear(k3, H2, n)

    # Small batch: single-tile path.
    batch = 16
    x = jax.random.normal(kx, (batch, m), jnp.float32)
    out = jax.block_until_ready(mlp_forward(x, w1, b1, w2, b2, w3, b3))
    assert out.shape == (batch, n)
    ref = ref_f32(x, w1, b1, w2, b2, w3, b3)
    # Tolerance reflects bf16 MXU inputs with f32 accumulation.
    assert jnp.allclose(out, ref, atol=5e-2, rtol=5e-2)

    # Larger batch: multi-tile grid + in-kernel chunking + ragged last tile.
    batch2 = 1500
    x2 = jax.random.normal(kx, (batch2, m), jnp.float32)
    out2 = jax.block_until_ready(mlp_forward(x2, w1, b1, w2, b2, w3, b3))
    assert out2.shape == (batch2, n)
    ref2 = ref_f32(x2, w1, b1, w2, b2, w3, b3)
    assert jnp.allclose(out2, ref2, atol=5e-2, rtol=5e-2)

    print("KERNEL_OK")
</pallas_src>

<mosaic_0001>
module attributes {stable_mosaic.version = 11 : i64} {
  func.func @mlp_kernel(%arg0: i32, %arg1: memref<16x32xf32, #tpu.memory_space<vmem>>, %arg2: memref<32x60xbf16, #tpu.memory_space<vmem>>, %arg3: memref<1x60xf32, #tpu.memory_space<vmem>>, %arg4: memref<60x40xbf16, #tpu.memory_space<vmem>>, %arg5: memref<1x40xf32, #tpu.memory_space<vmem>>, %arg6: memref<40x16xbf16, #tpu.memory_space<vmem>>, %arg7: memref<1x16xf32, #tpu.memory_space<vmem>>, %arg8: memref<16x16xf32, #tpu.memory_space<vmem>>) attributes {dimension_semantics = [#tpu.dimension_semantics<parallel>], iteration_bounds = array<i64: 1>, scalar_prefetch = 0 : i64, scratch_operands = 0 : i64, tpu.core_type = #tpu.core_type<tc>, window_params = [{transform_indices = @transform_0, window_bounds = array<i64: 16, 32>}, {pipeline_mode = #tpu.pipeline_mode<synchronous>, transform_indices = @transform_1, window_bounds = array<i64: 32, 60>}, {pipeline_mode = #tpu.pipeline_mode<synchronous>, transform_indices = @transform_2, window_bounds = array<i64: 1, 60>}, {pipeline_mode = #tpu.pipeline_mode<synchronous>, transform_indices = @transform_3, window_bounds = array<i64: 60, 40>}, {pipeline_mode = #tpu.pipeline_mode<synchronous>, transform_indices = @transform_4, window_bounds = array<i64: 1, 40>}, {pipeline_mode = #tpu.pipeline_mode<synchronous>, transform_indices = @transform_5, window_bounds = array<i64: 40, 16>}, {pipeline_mode = #tpu.pipeline_mode<synchronous>, transform_indices = @transform_6, window_bounds = array<i64: 1, 16>}, {transform_indices = @transform_7, window_bounds = array<i64: 16, 16>}]} {
    %c0 = arith.constant 0 : index
    %c0_0 = arith.constant 0 : index
    %0 = vector.load %arg2[%c0, %c0_0] : memref<32x60xbf16, #tpu.memory_space<vmem>>, vector<32x60xbf16>
    %c0_1 = arith.constant 0 : index
    %c0_2 = arith.constant 0 : index
    %1 = vector.load %arg4[%c0_1, %c0_2] : memref<60x40xbf16, #tpu.memory_space<vmem>>, vector<60x40xbf16>
    %c0_3 = arith.constant 0 : index
    %c0_4 = arith.constant 0 : index
    %2 = vector.load %arg6[%c0_3, %c0_4] : memref<40x16xbf16, #tpu.memory_space<vmem>>, vector<40x16xbf16>
    %c0_5 = arith.constant 0 : index
    %c0_6 = arith.constant 0 : index
    %3 = vector.load %arg3[%c0_5, %c0_6] : memref<1x60xf32, #tpu.memory_space<vmem>>, vector<1x60xf32>
    %4 = vector.shape_cast %3 : vector<1x60xf32> to vector<1x60xf32>
    %5 = vector.broadcast %4 : vector<1x60xf32> to vector<16x60xf32>
    %c0_7 = arith.constant 0 : index
    %c0_8 = arith.constant 0 : index
    %6 = vector.load %arg5[%c0_7, %c0_8] : memref<1x40xf32, #tpu.memory_space<vmem>>, vector<1x40xf32>
    %7 = vector.shape_cast %6 : vector<1x40xf32> to vector<1x40xf32>
    %8 = vector.broadcast %7 : vector<1x40xf32> to vector<16x40xf32>
    %c0_9 = arith.constant 0 : index
    %c0_10 = arith.constant 0 : index
    %9 = vector.load %arg7[%c0_9, %c0_10] : memref<1x16xf32, #tpu.memory_space<vmem>>, vector<1x16xf32>
    %10 = vector.shape_cast %9 : vector<1x16xf32> to vector<1x16xf32>
    %11 = vector.broadcast %10 : vector<1x16xf32> to vector<16x16xf32>
    %c0_11 = arith.constant 0 : index
    %c0_12 = arith.constant 0 : index
    %12 = vector.load %arg1[%c0_11, %c0_12] : memref<16x32xf32, #tpu.memory_space<vmem>>, vector<16x32xf32>
    %13 = arith.truncf %12 : vector<16x32xf32> to vector<16x32xbf16>
    %cst = arith.constant dense<0.000000e+00> : vector<16x60xf32>
    %14 = tpu.matmul %13, %0, %cst {dimension_numbers = #tpu.dot_dimension_numbers<[1], [0], [0], [1], [0, 0, 1, 1], [], []>} : vector<16x32xbf16>, vector<32x60xbf16>, vector<16x60xf32> -> vector<16x60xf32>
    %15 = arith.addf %14, %5 : vector<16x60xf32>
    %cst_13 = arith.constant 0.000000e+00 : f32
    %16 = vector.broadcast %cst_13 : f32 to vector<16x60xf32>
    %17 = arith.maximumf %15, %16 : vector<16x60xf32>
    %18 = arith.truncf %17 : vector<16x60xf32> to vector<16x60xbf16>
    %cst_14 = arith.constant dense<0.000000e+00> : vector<16x40xf32>
    %19 = tpu.matmul %18, %1, %cst_14 {dimension_numbers = #tpu.dot_dimension_numbers<[1], [0], [0], [1], [0, 0, 1, 1], [], []>} : vector<16x60xbf16>, vector<60x40xbf16>, vector<16x40xf32> -> vector<16x40xf32>
    %20 = arith.addf %19, %8 : vector<16x40xf32>
    %cst_15 = arith.constant 0.000000e+00 : f32
    %21 = vector.broadcast %cst_15 : f32 to vector<16x40xf32>
    %22 = arith.maximumf %20, %21 : vector<16x40xf32>
    %23 = arith.truncf %22 : vector<16x40xf32> to vector<16x40xbf16>
    %cst_16 = arith.constant dense<0.000000e+00> : vector<16x16xf32>
    %24 = tpu.matmul %23, %2, %cst_16 {dimension_numbers = #tpu.dot_dimension_numbers<[1], [0], [0], [1], [0, 0, 1, 1], [], []>} : vector<16x40xbf16>, vector<40x16xbf16>, vector<16x16xf32> -> vector<16x16xf32>
    %25 = arith.addf %24, %11 : vector<16x16xf32>
    %c0_17 = arith.constant 0 : index
    %c0_18 = arith.constant 0 : index
    %26 = vector.load %arg8[%c0_17, %c0_18] : memref<16x16xf32, #tpu.memory_space<vmem>>, vector<16x16xf32>
    tpu.vector_store %arg8[%c0_17, %c0_18], %25 {strides = array<i32>} : memref<16x16xf32, #tpu.memory_space<vmem>>, vector<16x16xf32>,
    return
  }
  func.func @transform_0(%arg0: i32) -> (i32, i32) {
    %c0_i32 = arith.constant 0 : i32
    %c0_i32_0 = arith.constant 0 : i32
    return %arg0, %c0_i32 : i32, i32
  }
  func.func @transform_1(%arg0: i32) -> (i32, i32) {
    %c0_i32 = arith.constant 0 : i32
    %c0_i32_0 = arith.constant 0 : i32
    %c0_i32_1 = arith.constant 0 : i32
    return %c0_i32, %c0_i32_0 : i32, i32
  }
  func.func @transform_2(%arg0: i32) -> (i32, i32) {
    %c0_i32 = arith.constant 0 : i32
    %c0_i32_0 = arith.constant 0 : i32
    %c0_i32_1 = arith.constant 0 : i32
    return %c0_i32, %c0_i32_0 : i32, i32
  }
  func.func @transform_3(%arg0: i32) -> (i32, i32) {
    %c0_i32 = arith.constant 0 : i32
    %c0_i32_0 = arith.constant 0 : i32
    %c0_i32_1 = arith.constant 0 : i32
    return %c0_i32, %c0_i32_0 : i32, i32
  }
  func.func @transform_4(%arg0: i32) -> (i32, i32) {
    %c0_i32 = arith.constant 0 : i32
    %c0_i32_0 = arith.constant 0 : i32
    %c0_i32_1 = arith.constant 0 : i32
    return %c0_i32, %c0_i32_0 : i32, i32
  }
  func.func @transform_5(%arg0: i32) -> (i32, i32) {
    %c0_i32 = arith.constant 0 : i32
    %c0_i32_0 = arith.constant 0 : i32
    %c0_i32_1 = arith.constant 0 : i32
    return %c0_i32, %c0_i32_0 : i32, i32
  }
  func.func @transform_6(%arg0: i32) -> (i32, i32) {
    %c0_i32 = arith.constant 0 : i32
    %c0_i32_0 = arith.constant 0 : i32
    %c0_i32_1 = arith.constant 0 : i32
    return %c0_i32, %c0_i32_0 : i32, i32
  }
  func.func @transform_7(%arg0: i32) -> (i32, i32) {
    %c0_i32 = arith.constant 0 : i32
    %c0_i32_0 = arith.constant 0 : i32
    return %arg0, %c0_i32 : i32, i32
  }
}

</mosaic_0001>

<llo_original>
// kernel: mlp_forward.1
$region0: #{mlp_forward.1}
  #allocation0 [shape = 'u32[]', space=smem, size = 0x4, offset = 0x4, fixed_abs, tag = 'smem constant byte address 0x4 - core index']
  #allocation1 [shape = 'u32[144,128]{1,0:T(1,128)}', space=vmem, size = 0x12000, scoped, tag = 'internal scratch']
  %s0 = inlined_call_operand.vmem [shape: f32[16,32], index: 0, kind: input, shape index: {}]
  %s1 = inlined_call_operand.vmem [shape: bf16[32,60], index: 1, kind: input, shape index: {}]
  %s2 = inlined_call_operand.vmem [shape: f32[1,60], index: 2, kind: input, shape index: {}]
  %s3 = inlined_call_operand.vmem [shape: bf16[60,40], index: 3, kind: input, shape index: {}]
  %s4 = inlined_call_operand.vmem [shape: f32[1,40], index: 4, kind: input, shape index: {}]
  %s5 = inlined_call_operand.vmem [shape: bf16[40,16], index: 5, kind: input, shape index: {}]
  %s6 = inlined_call_operand.vmem [shape: f32[1,16], index: 6, kind: input, shape index: {}]
  %s7 = inlined_call_operand.hbm [shape: f32[16,16], index: 7, kind: output, shape index: {}]
  %s8 = sld [smem:[#allocation0]]
  $region38: #{mlp_forward.1} parent=0
    _
  %s10 = ssub.s32 1, %s8
  %s11 = scalar_select 0, %s10, %s8
  $region1: #{mlp_forward.1} parent=0
    #allocation2 [shape = 'u8[8192]{0}', space=vmem, size = 0x2000, scoped, tag = 'output window, operand 0, single buffered']
    #allocation3 [shape = 's32[1]{0}', space=sflag, size = 0x4, scoped, tag = 'scoped memory for mlp_forward.1']
    %12 = vsyncpa [#allocation3], 0
    // Predicated region
    $region2: #{mlp_forward.1} parent=1 // pred_check
      _
    $region3: #{mlp_forward.1} parent=1 // pred_check_branch
      %14 = sbr.rel (0) target = $region5
    $region4: #{mlp_forward.1} parent=1 // pred_region
      _
    $region5: #{mlp_forward.1} parent=1 // pred_fallthru
      _
    // Predicated region
    $region6: #{mlp_forward.1} parent=1 // pred_check
      _
    $region7: #{mlp_forward.1} parent=1 // pred_check_branch
      %16 = sbr.rel (0) target = $region9
    $region8: #{mlp_forward.1} parent=1 // pred_region
      _
    $region9: #{mlp_forward.1} parent=1 // pred_fallthru
      _
    // Predicated region
    $region10: #{mlp_forward.1} parent=1 // pred_check
      _
    $region11: #{mlp_forward.1} parent=1 // pred_check_branch
      %18 = sbr.rel (0) target = $region13
    $region12: #{mlp_forward.1} parent=1 // pred_region
      _
    $region13: #{mlp_forward.1} parent=1 // pred_fallthru
      _
    // Predicated region
    $region14: #{mlp_forward.1} parent=1 // pred_check
      _
    $region15: #{mlp_forward.1} parent=1 // pred_check_branch
      %20 = sbr.rel (0) target = $region17
    $region16: #{mlp_forward.1} parent=1 // pred_region
      _
    $region17: #{mlp_forward.1} parent=1 // pred_fallthru
      _
    // Predicated region
    $region18: #{mlp_forward.1} parent=1 // pred_check
      _
    $region19: #{mlp_forward.1} parent=1 // pred_check_branch
      %22 = sbr.rel (0) target = $region21
    $region20: #{mlp_forward.1} parent=1 // pred_region
      _
    $region21: #{mlp_forward.1} parent=1 // pred_fallthru
      _
    // Predicated region
    $region22: #{mlp_forward.1} parent=1 // pred_check
      _
    $region23: #{mlp_forward.1} parent=1 // pred_check_branch
      %24 = sbr.rel (0) target = $region25
    $region24: #{mlp_forward.1} parent=1 // pred_region
      _
    $region25: #{mlp_forward.1} parent=1 // pred_fallthru
      _
    // Predicated region
    $region26: #{mlp_forward.1} parent=1 // pred_check
      _
    $region27: #{mlp_forward.1} parent=1 // pred_check_branch
      %26 = sbr.rel (0) target = $region29
    $region28: #{mlp_forward.1} parent=1 // pred_region
      _
    $region29: #{mlp_forward.1} parent=1 // pred_fallthru
      _
    %v28 = vld [vmem:[%s1] sm:$0xf]
    %v29 = vld [vmem:[%s1 + $0x4] sm:$0xf]
    %v30 = vld [vmem:[%s1 + $0x8] sm:$0xf]
    %v31 = vld [vmem:[%s1 + $0xc] sm:$0xf]
    %v32 = vld [vmem:[%s3] sm:$0xf]
    %v33 = vld [vmem:[%s3 + $0x4] sm:$0xf]
    %v34 = vld [vmem:[%s3 + $0x8] sm:$0xf]
    %v35 = vld [vmem:[%s3 + $0xc] sm:$0xf]
    %v36 = vld [vmem:[%s3 + $0x10] sm:$0xf]
    %v37 = vld [vmem:[%s3 + $0x14] sm:$0xf]
    %v38 = vld [vmem:[%s3 + $0x18] sm:$0xf]
    %v39 = vld [vmem:[%s3 + $0x1c] sm:$0x3]
    %v40 = vld [vmem:[%s5] sm:$0xf]
    %v41 = vld [vmem:[%s5 + $0x4] sm:$0xf]
    %v42 = vld [vmem:[%s5 + $0x8] sm:$0xf]
    %v43 = vld [vmem:[%s5 + $0xc] sm:$0xf]
    %v44 = vld [vmem:[%s5 + $0x10] sm:$0xf]
    %v45 = vld [vmem:[%s2] sm:$0x1]
    %v47 = vlaneseq
    %v48 = vshrl.u32 %v47, 7
    %v49 = vsub.s32 0, %v48
    %v50 = vrot.slane %v45, %v49
    %v52 = vld [vmem:[%s4] sm:$0x1]
    %v54 = vlaneseq
    %v55 = vshrl.u32 %v54, 7
    %v56 = vsub.s32 0, %v55
    %v57 = vrot.slane %v52, %v56
    %v59 = vld [vmem:[%s6] sm:$0x1]
    %v61 = vlaneseq
    %v62 = vshrl.u32 %v61, 7
    %v63 = vsub.s32 0, %v62
    %v64 = vrot.slane %v59, %v63
    %v66 = vld [vmem:[%s0] sm:$0xff]
    %v67 = vld [vmem:[%s0 + $0x8] sm:$0xff]
    %v68 = vpack.c.bf16 %v67, %v66
    %v73 = vunpack.c.l.b16 %v28
    %v74 = vunpack.c.l.b16 %v29
    %v75 = vunpack.c.l.b16 %v30
    %v76 = vunpack.c.l.b16 %v31
    %v77 = vpack.c.b16 %v74, %v73
    %v78 = vpack.c.b16 %v76, %v75
    %vm81 = vcmask 261120
    %v83 = vsel %vm81, %v68, 0
    %85 = vmatprep.subr.bf16.mxu0 0
    %86 = vmatpush1.bf16.msra.mxu0 %v77
    %87 = vmatprep.subr.bf16.mxu0 0
    %88 = vmatpush1.bf16.msra.mxu0 %v78
    %89 = vmatprep.subr.bf16.mxu0 0
    %90 = vmatpush1.bf16.msra.mxu0 0
    %91 = vmatprep.subr.bf16.mxu0 0
    %92 = vmatpush1.bf16.msra.mxu0 0
    %93 = vmatprep.subr.bf16.mxu0 0
    %94 = vmatpush1.bf16.msra.mxu0 0
    %95 = vmatprep.subr.bf16.mxu0 0
    %96 = vmatpush1.bf16.msra.mxu0 0
    %97 = vmatprep.subr.bf16.mxu0 0
    %98 = vmatpush1.bf16.msra.mxu0 0
    %99 = vmatprep.subr.bf16.mxu0 0
    %100 = vmatpush1.bf16.msra.mxu0 0
    %101 = vmatprep.subr.bf16.mxu0 0
    %102 = vmatpush1.bf16.msra.mxu0 0
    %103 = vmatprep.subr.bf16.mxu0 0
    %104 = vmatpush1.bf16.msra.mxu0 0
    %105 = vmatprep.subr.bf16.mxu0 0
    %106 = vmatpush1.bf16.msra.mxu0 0
    %107 = vmatprep.subr.bf16.mxu0 0
    %108 = vmatpush1.bf16.msra.mxu0 0
    %109 = vmatprep.subr.bf16.mxu0 0
    %110 = vmatpush1.bf16.msra.mxu0 0
    %111 = vmatprep.subr.bf16.mxu0 0
    %112 = vmatpush1.bf16.msra.mxu0 0
    %113 = vmatprep.subr.bf16.mxu0 0
    %114 = vmatpush1.bf16.msra.mxu0 0
    %115 = vmatprep.subr.bf16.mxu0 0
    %116 = vmatpush1.bf16.msra.mxu0 0
    %117 = vmatprep.mubr.bf16.mxu0 0
    %118 = vmatmul.mubr.bf16.gmra.mrb[0].mxu0 %v83
    %v119 = vpop.f32.mrb[0].mxu0
    %v120 = vadd.f32 %v50, %v119
    %v121 = vpop.f32.mrb[0].mxu0
    %v122 = vpop.f32.mrb[0].mxu0
    %v123 = vadd.f32 %v50, %v122
    %v124 = vpop.f32.mrb[0].mxu0
    %125 = vdwg.mxu0
    %v126 = vmax.f32 %v120, 0.0
    %v127 = vmax.f32 %v123, 0.0
    %v128 = vpack.c.bf16 %v127, %v126
    %v137 = vunpack.c.l.b16 %v32
    %v138 = vunpack.c.l.b16 %v33
    %v139 = vunpack.c.l.b16 %v34
    %v140 = vunpack.c.l.b16 %v35
    %v141 = vunpack.c.l.b16 %v36
    %v142 = vunpack.c.l.b16 %v37
    %v143 = vunpack.c.l.b16 %v38
    %v144 = vunpack.c.l.b16 %v39
    %v145 = vpack.c.b16 %v138, %v137
    %v146 = vpack.c.b16 %v140, %v139
    %v147 = vpack.c.b16 %v142, %v141
    %v148 = vpack.c.b16 %v144, %v143
    %vm152 = vcmask 490496
    %v154 = vsel %vm152, %v128, 0
    %vm156 = vcmask 1045504
    %v158 = vsel %vm156, %v148, 0
    %160 = vmatprep.subr.bf16.mxu0 0
    %161 = vmatpush1.bf16.msra.mxu0 %v145
    %162 = vmatprep.subr.bf16.mxu0 0
    %163 = vmatpush1.bf16.msra.mxu0 %v146
    %164 = vmatprep.subr.bf16.mxu0 0
    %165 = vmatpush1.bf16.msra.mxu0 %v147
    %166 = vmatprep.subr.bf16.mxu0 0
    %167 = vmatpush1.bf16.msra.mxu0 %v158
    %168 = vmatprep.subr.bf16.mxu0 0
    %169 = vmatpush1.bf16.msra.mxu0 0
    %170 = vmatprep.subr.bf16.mxu0 0
    %171 = vmatpush1.bf16.msra.mxu0 0
    %172 = vmatprep.subr.bf16.mxu0 0
    %173 = vmatpush1.bf16.msra.mxu0 0
    %174 = vmatprep.subr.bf16.mxu0 0
    %175 = vmatpush1.bf16.msra.mxu0 0
    %176 = vmatprep.subr.bf16.mxu0 0
    %177 = vmatpush1.bf16.msra.mxu0 0
    %178 = vmatprep.subr.bf16.mxu0 0
    %179 = vmatpush1.bf16.msra.mxu0 0
    %180 = vmatprep.subr.bf16.mxu0 0
    %181 = vmatpush1.bf16.msra.mxu0 0
    %182 = vmatprep.subr.bf16.mxu0 0
    %183 = vmatpush1.bf16.msra.mxu0 0
    %184 = vmatprep.subr.bf16.mxu0 0
    %185 = vmatpush1.bf16.msra.mxu0 0
    %186 = vmatprep.subr.bf16.mxu0 0
    %187 = vmatpush1.bf16.msra.mxu0 0
    %188 = vmatprep.subr.bf16.mxu0 0
    %189 = vmatpush1.bf16.msra.mxu0 0
    %190 = vmatprep.subr.bf16.mxu0 0
    %191 = vmatpush1.bf16.msra.mxu0 0
    %192 = vmatprep.mubr.bf16.mxu0 0
    %193 = vmatmul.mubr.bf16.gmra.mrb[0].mxu0 %v154
    %v194 = vpop.f32.mrb[0].mxu0
    %v195 = vadd.f32 %v57, %v194
    %v196 = vpop.f32.mrb[0].mxu0
    %v197 = vpop.f32.mrb[0].mxu0
    %v198 = vadd.f32 %v57, %v197
    %v199 = vpop.f32.mrb[0].mxu0
    %200 = vdwg.mxu0
    %v201 = vmax.f32 %v195, 0.0
    %v202 = vmax.f32 %v198, 0.0
    %v203 = vpack.c.bf16 %v202, %v201
    %v209 = vunpack.c.l.b16 %v40
    %v210 = vunpack.c.l.b16 %v41
    %v211 = vunpack.c.l.b16 %v42
    %v212 = vunpack.c.l.b16 %v43
    %v213 = vunpack.c.l.b16 %v44
    %v214 = vpack.c.b16 %v210, %v209
    %v215 = vpack.c.b16 %v212, %v211
    %v216 = vpack.c.b16 %v213, %v213
    %vm219 = vcmask 326656
    %v221 = vsel %vm219, %v203, 0
    %vm223 = vcmask 1043456
    %v225 = vsel %vm223, %v216, 0
    %227 = vmatprep.subr.bf16.mxu0 0
    %228 = vmatpush1.bf16.msra.mxu0 %v214
    %229 = vmatprep.subr.bf16.mxu0 0
    %230 = vmatpush1.bf16.msra.mxu0 %v215
    %231 = vmatprep.subr.bf16.mxu0 0
    %232 = vmatpush1.bf16.msra.mxu0 %v225
    %233 = vmatprep.subr.bf16.mxu0 0
    %234 = vmatpush1.bf16.msra.mxu0 0
    %235 = vmatprep.subr.bf16.mxu0 0
    %236 = vmatpush1.bf16.msra.mxu0 0
    %237 = vmatprep.subr.bf16.mxu0 0
    %238 = vmatpush1.bf16.msra.mxu0 0
    %239 = vmatprep.subr.bf16.mxu0 0
    %240 = vmatpush1.bf16.msra.mxu0 0
    %241 = vmatprep.subr.bf16.mxu0 0
    %242 = vmatpush1.bf16.msra.mxu0 0
    %243 = vmatprep.subr.bf16.mxu0 0
    %244 = vmatpush1.bf16.msra.mxu0 0
    %245 = vmatprep.subr.bf16.mxu0 0
    %246 = vmatpush1.bf16.msra.mxu0 0
    %247 = vmatprep.subr.bf16.mxu0 0
    %248 = vmatpush1.bf16.msra.mxu0 0
    %249 = vmatprep.subr.bf16.mxu0 0
    %250 = vmatpush1.bf16.msra.mxu0 0
    %251 = vmatprep.subr.bf16.mxu0 0
    %252 = vmatpush1.bf16.msra.mxu0 0
    %253 = vmatprep.subr.bf16.mxu0 0
    %254 = vmatpush1.bf16.msra.mxu0 0
    %255 = vmatprep.subr.bf16.mxu0 0
    %256 = vmatpush1.bf16.msra.mxu0 0
    %257 = vmatprep.subr.bf16.mxu0 0
    %258 = vmatpush1.bf16.msra.mxu0 0
    %259 = vmatprep.mubr.bf16.mxu0 0
    %260 = vmatmul.mubr.bf16.gmra.mrb[0].mxu0 %v221
    %v261 = vpop.f32.mrb[0].mxu0
    %v262 = vadd.f32 %v64, %v261
    %v263 = vpop.f32.mrb[0].mxu0
    %v264 = vpop.f32.mrb[0].mxu0
    %v265 = vadd.f32 %v64, %v264
    %v266 = vpop.f32.mrb[0].mxu0
    %267 = vdwg.mxu0
    %vm268 = vcmask 130048
    %269 = vst.msk [vmem:[#allocation2] sm:$0xff] %vm268, %v262
    %270 = vst.msk [vmem:[#allocation2 + $0x8] sm:$0xff] %vm268, %v265
    // Predicated region
    $region30: #{mlp_forward.1} parent=1 // pred_check
      _
    $region31: #{mlp_forward.1} parent=1 // pred_check_branch
      %272 = sbr.rel (0) target = $region33
    $region32: #{mlp_forward.1} parent=1 // pred_region
      %s274 = ssub.s32 256, 256
      %275 = vsyncadd [#allocation3], %s274
      %s276 = sshll.u32 [#allocation2], 4
      %s277 = int_to_ptr.vmem [resolvable:$true] %s276
      %282 = dma.vmem_to_hbm [thread:$0]  %s277, 256, %s7, [#allocation3], 128, 128, 8
    $region33: #{mlp_forward.1} parent=1 // pred_fallthru
      _
    // Predicated region
    $region34: #{mlp_forward.1} parent=1 // pred_check
      _
    $region35: #{mlp_forward.1} parent=1 // pred_check_branch
      %284 = sbr.rel (0) target = $region37
    $region36: #{mlp_forward.1} parent=1 // pred_region
      %285 = dma.done [#allocation3], 256
    $region37: #{mlp_forward.1} parent=1 // pred_fallthru
      _
    %286 = vsyncpa [#allocation3], 1

</llo_original>
